<compile_context>
chip_gen: v5e
topology: v5e:2x2
jax: 0.10.0
libtpu: 0.0.40
codegen_flags: <defaults>
</compile_context>

<pallas_src>
import functools

import jax
import jax.numpy as jnp
from jax.experimental import pallas as pl
from jax.experimental.pallas import tpu as pltpu


def elman_model_kernel(tok_ref, ptab_ref, w1h_ref, w2_ref, b2_ref,
                       w3_ref, b3_ref, out_ref, *, seq_len, batch_pad, vocab):
    """Single-invocation Elman model.

    tok_ref  : (T*Bp, 1) int32 token ids, time-major (row = t*Bp + b), padded
    ptab_ref : (V, H)    fused table  emb @ W1x + b1
    w1h_ref  : (H, H)    lin1 weight, hidden part (pre-transposed)
    w2_ref   : (H, H)    Elman lin2 weight (pre-transposed)
    b2_ref   : (1, H)
    w3_ref   : (H, Cp)   final linear2 weight (pre-transposed, lane-padded)
    b3_ref   : (1, Cp)
    out_ref  : (Bp, Cp)  logits slab (lane-dense; wrapper slices [:B, :C])
    """
    T, Bp, V = seq_len, batch_pad, vocab
    H = w1h_ref.shape[0]

    # --- In-kernel embedding + input-projection gather via one-hot matmul ---
    #   p_all[r, :] = P_table[token[r], :]   for all T*Bp rows at once.
    tok = tok_ref[...]                                            # (T*Bp, 1)
    lane_v = jax.lax.broadcasted_iota(jnp.int32, (T * Bp, V), 1)  # vocab iota
    onehot = jnp.where(lane_v == tok, 1.0, 0.0)                   # (T*Bp, V)
    p_all = jnp.dot(onehot, ptab_ref[...],
                    preferred_element_type=jnp.float32)           # (T*Bp, H)

    w1h = w1h_ref[...]
    w2 = w2_ref[...]

    # --- Recurrence, fully unrolled (T is a small static constant), with the
    #     Elman output projection and running time-max fused into the loop. ---
    h = jnp.zeros((Bp, H), jnp.float32)
    pooled = jnp.zeros((Bp, H), jnp.float32)
    for t in range(T):
        p_t = p_all[t * Bp:(t + 1) * Bp, :]                       # aligned (Bp, H)
        pre = p_t + jnp.dot(h, w1h, preferred_element_type=jnp.float32)
        h = jnp.tanh(pre)
        o_t = jnp.dot(h, w2, preferred_element_type=jnp.float32)  # (Bp, H)
        pooled = o_t if t == 0 else jnp.maximum(pooled, o_t)

    # b2 is time-invariant -> add once after the max (equivalent).
    pooled = pooled + b2_ref[...]                                 # (Bp, H)

    # --- Final classifier (lane-dense output slab). ---
    logits = (jnp.dot(pooled, w3_ref[...],
                      preferred_element_type=jnp.float32) + b3_ref[...])
    out_ref[...] = logits.astype(out_ref.dtype)


def model4_elman_forward(tokens, emb_table, w1x, w1h, b1, w2, b2, w3, b3):
    """tokens: int32 [B, T]. Returns logits [B, num_classes]."""
    B, T = tokens.shape
    V, _E = emb_table.shape
    H = w1h.shape[0]
    C = w3.shape[1]

    BP = 8      # pad batch to one f32 sublane tile
    CP = 128    # lane-dense classifier output width

    # Fused embedding + input projection table (exact per-row):
    #   P_table[v] = emb[v] @ W1x + b1
    p_table = (jnp.dot(emb_table.astype(jnp.float32), w1x)
               + b1.reshape(1, H)).astype(jnp.float32)            # (V, H)

    # Time-major token ids, batch padded to BP with token 0, flattened (row = t*BP + b).
    tok_tm = jnp.transpose(tokens).astype(jnp.int32)              # (T, B)
    tok_pad = jnp.pad(tok_tm, ((0, 0), (0, BP - B)))              # (T, BP)
    tok_flat = tok_pad.reshape(T * BP, 1)                         # (T*BP, 1)

    # Lane-dense classifier weights.
    w3p = jnp.pad(w3.astype(jnp.float32), ((0, 0), (0, CP - C)))  # (H, CP)
    b3p = jnp.pad(b3.reshape(1, C).astype(jnp.float32),
                  ((0, 0), (0, CP - C)))                          # (1, CP)
    b2_2d = b2.reshape(1, H).astype(jnp.float32)

    kernel = functools.partial(elman_model_kernel,
                               seq_len=T, batch_pad=BP, vocab=V)
    full = lambda i: (0, 0)   # every operand is a single full-array block

    out = pl.pallas_call(
        kernel,
        out_shape=jax.ShapeDtypeStruct((BP, CP), jnp.float32),
        grid_spec=pltpu.PrefetchScalarGridSpec(
            num_scalar_prefetch=0,
            grid=(1,),                        # whole model in one invocation
            in_specs=[
                pl.BlockSpec((T * BP, 1), full),   # token ids
                pl.BlockSpec((V, H), full),        # fused emb@W1x + b1 table
                pl.BlockSpec((H, H), full),        # w1h
                pl.BlockSpec((H, H), full),        # w2
                pl.BlockSpec((1, H), full),        # b2
                pl.BlockSpec((H, CP), full),       # w3 (lane-padded)
                pl.BlockSpec((1, CP), full),       # b3 (lane-padded)
            ],
            out_specs=pl.BlockSpec((BP, CP), full),
        ),
        compiler_params=pltpu.CompilerParams(
            dimension_semantics=("arbitrary",)),
    )(tok_flat, p_table, w1h.astype(jnp.float32), w2.astype(jnp.float32),
      b2_2d, w3p, b3p)

    # Slice away batch / class padding.
    return out[:B, :C]


def reference_forward(tokens, emb_table, w1x, w1h, b1, w2, b2, w3, b3):
    """Pure-JAX reference mirroring the PyTorch forward."""
    x = jnp.take(emb_table, tokens, axis=0).astype(jnp.float32)   # (B, T, E)
    B, T, _E = x.shape
    H = w1h.shape[0]
    hidden = jnp.zeros((B, H), jnp.float32)
    outs = []
    for i in range(T):
        hidden = jnp.tanh(x[:, i, :] @ w1x + hidden @ w1h + b1)
        outs.append(hidden @ w2 + b2)
    seq_out = jnp.stack(outs, axis=1)         # (B, T, H)
    pooled = jnp.max(seq_out, axis=1)         # (B, H)
    return pooled @ w3 + b3                   # (B, C)


if __name__ == "__main__":
    # Small shapes consistent with the module.
    VOCAB, EMB, HID, NCLS = 50, 32, 32, 8
    B, T = 2, 8

    key = jax.random.PRNGKey(0)
    ks = jax.random.split(key, 9)

    emb_table = jax.random.normal(ks[0], (VOCAB, EMB), jnp.float32) * 0.1
    # lin1: (H, E+H) in torch; split and pre-transpose to (E,H) and (H,H).
    w1x = jax.random.normal(ks[1], (EMB, HID), jnp.float32) * 0.1
    w1h = jax.random.normal(ks[2], (HID, HID), jnp.float32) * 0.1
    b1 = jax.random.normal(ks[3], (HID,), jnp.float32) * 0.1
    # Elman lin2: (H, H) pre-transposed.
    w2 = jax.random.normal(ks[4], (HID, HID), jnp.float32) * 0.1
    b2 = jax.random.normal(ks[5], (HID,), jnp.float32) * 0.1
    # Model4 linear2: (C, H) in torch; pre-transposed to (H, C).
    w3 = jax.random.normal(ks[6], (HID, NCLS), jnp.float32) * 0.1
    b3 = jax.random.normal(ks[7], (NCLS,), jnp.float32) * 0.1

    tokens = jax.random.randint(ks[8], (B, T), 0, VOCAB, jnp.int32)

    logits = model4_elman_forward(tokens, emb_table, w1x, w1h, b1, w2, b2, w3, b3)
    logits = jax.block_until_ready(logits)

    ref = reference_forward(tokens, emb_table, w1x, w1h, b1, w2, b2, w3, b3)
    assert logits.shape == (B, NCLS)
    assert jnp.allclose(logits, ref, atol=1e-4, rtol=1e-4), "mismatch vs reference"

    print("KERNEL_OK")
</pallas_src>

<mosaic_0001>
module attributes {stable_mosaic.version = 11 : i64} {
  func.func @elman_model_kernel(%arg0: i32, %arg1: memref<64x1xi32, #tpu.memory_space<vmem>>, %arg2: memref<50x32xf32, #tpu.memory_space<vmem>>, %arg3: memref<32x32xf32, #tpu.memory_space<vmem>>, %arg4: memref<32x32xf32, #tpu.memory_space<vmem>>, %arg5: memref<1x32xf32, #tpu.memory_space<vmem>>, %arg6: memref<32x128xf32, #tpu.memory_space<vmem>>, %arg7: memref<1x128xf32, #tpu.memory_space<vmem>>, %arg8: memref<8x128xf32, #tpu.memory_space<vmem>>) attributes {dimension_semantics = [#tpu.dimension_semantics<arbitrary>], iteration_bounds = array<i64: 1>, scalar_prefetch = 0 : i64, scratch_operands = 0 : i64, tpu.core_type = #tpu.core_type<tc>, window_params = [{pipeline_mode = #tpu.pipeline_mode<synchronous>, transform_indices = @transform_0, window_bounds = array<i64: 64, 1>}, {pipeline_mode = #tpu.pipeline_mode<synchronous>, transform_indices = @transform_1, window_bounds = array<i64: 50, 32>}, {pipeline_mode = #tpu.pipeline_mode<synchronous>, transform_indices = @transform_2, window_bounds = array<i64: 32, 32>}, {pipeline_mode = #tpu.pipeline_mode<synchronous>, transform_indices = @transform_3, window_bounds = array<i64: 32, 32>}, {pipeline_mode = #tpu.pipeline_mode<synchronous>, transform_indices = @transform_4, window_bounds = array<i64: 1, 32>}, {pipeline_mode = #tpu.pipeline_mode<synchronous>, transform_indices = @transform_5, window_bounds = array<i64: 32, 128>}, {pipeline_mode = #tpu.pipeline_mode<synchronous>, transform_indices = @transform_6, window_bounds = array<i64: 1, 128>}, {pipeline_mode = #tpu.pipeline_mode<synchronous>, transform_indices = @transform_7, window_bounds = array<i64: 8, 128>}]} {
    %c0 = arith.constant 0 : index
    %c0_0 = arith.constant 0 : index
    %0 = vector.load %arg1[%c0, %c0_0] : memref<64x1xi32, #tpu.memory_space<vmem>>, vector<64x1xi32>
    %1 = tpu.iota {dimensions = array<i32: 1>} : vector<64x50xi32>
    %2 = vector.broadcast %0 : vector<64x1xi32> to vector<64x50xi32>
    %3 = arith.cmpi eq, %1, %2 : vector<64x50xi32>
    %cst = arith.constant 1.000000e+00 : f32
    %cst_1 = arith.constant 0.000000e+00 : f32
    %4 = vector.broadcast %cst : f32 to vector<64x50xf32>
    %5 = vector.broadcast %cst_1 : f32 to vector<64x50xf32>
    %6 = arith.select %3, %4, %5 : vector<64x50xi1>, vector<64x50xf32>
    %c0_2 = arith.constant 0 : index
    %c0_3 = arith.constant 0 : index
    %7 = vector.load %arg2[%c0_2, %c0_3] : memref<50x32xf32, #tpu.memory_space<vmem>>, vector<50x32xf32>
    %cst_4 = arith.constant dense<0.000000e+00> : vector<64x32xf32>
    %8 = tpu.matmul %6, %7, %cst_4 {dimension_numbers = #tpu.dot_dimension_numbers<[1], [0], [0], [1], [0, 0, 1, 1], [], []>} : vector<64x50xf32>, vector<50x32xf32>, vector<64x32xf32> -> vector<64x32xf32>
    %c0_5 = arith.constant 0 : index
    %c0_6 = arith.constant 0 : index
    %9 = vector.load %arg3[%c0_5, %c0_6] : memref<32x32xf32, #tpu.memory_space<vmem>>, vector<32x32xf32>
    %c0_7 = arith.constant 0 : index
    %c0_8 = arith.constant 0 : index
    %10 = vector.load %arg4[%c0_7, %c0_8] : memref<32x32xf32, #tpu.memory_space<vmem>>, vector<32x32xf32>
    %cst_9 = arith.constant 0.000000e+00 : f32
    %11 = vector.broadcast %cst_9 : f32 to vector<8x32xf32>
    %12 = vector.extract_strided_slice %8 {offsets = [0, 0], sizes = [8, 32], strides = [1, 1]} : vector<64x32xf32> to vector<8x32xf32>
    %cst_10 = arith.constant dense<0.000000e+00> : vector<8x32xf32>
    %13 = tpu.matmul %11, %9, %cst_10 {dimension_numbers = #tpu.dot_dimension_numbers<[1], [0], [0], [1], [0, 0, 1, 1], [], []>} : vector<8x32xf32>, vector<32x32xf32>, vector<8x32xf32> -> vector<8x32xf32>
    %14 = arith.addf %12, %13 : vector<8x32xf32>
    %15 = math.tanh %14 : vector<8x32xf32>
    %cst_11 = arith.constant dense<0.000000e+00> : vector<8x32xf32>
    %16 = tpu.matmul %15, %10, %cst_11 {dimension_numbers = #tpu.dot_dimension_numbers<[1], [0], [0], [1], [0, 0, 1, 1], [], []>} : vector<8x32xf32>, vector<32x32xf32>, vector<8x32xf32> -> vector<8x32xf32>
    %17 = vector.extract_strided_slice %8 {offsets = [8, 0], sizes = [8, 32], strides = [1, 1]} : vector<64x32xf32> to vector<8x32xf32>
    %cst_12 = arith.constant dense<0.000000e+00> : vector<8x32xf32>
    %18 = tpu.matmul %15, %9, %cst_12 {dimension_numbers = #tpu.dot_dimension_numbers<[1], [0], [0], [1], [0, 0, 1, 1], [], []>} : vector<8x32xf32>, vector<32x32xf32>, vector<8x32xf32> -> vector<8x32xf32>
    %19 = arith.addf %17, %18 : vector<8x32xf32>
    %20 = math.tanh %19 : vector<8x32xf32>
    %cst_13 = arith.constant dense<0.000000e+00> : vector<8x32xf32>
    %21 = tpu.matmul %20, %10, %cst_13 {dimension_numbers = #tpu.dot_dimension_numbers<[1], [0], [0], [1], [0, 0, 1, 1], [], []>} : vector<8x32xf32>, vector<32x32xf32>, vector<8x32xf32> -> vector<8x32xf32>
    %22 = arith.maximumf %16, %21 : vector<8x32xf32>
    %23 = vector.extract_strided_slice %8 {offsets = [16, 0], sizes = [8, 32], strides = [1, 1]} : vector<64x32xf32> to vector<8x32xf32>
    %cst_14 = arith.constant dense<0.000000e+00> : vector<8x32xf32>
    %24 = tpu.matmul %20, %9, %cst_14 {dimension_numbers = #tpu.dot_dimension_numbers<[1], [0], [0], [1], [0, 0, 1, 1], [], []>} : vector<8x32xf32>, vector<32x32xf32>, vector<8x32xf32> -> vector<8x32xf32>
    %25 = arith.addf %23, %24 : vector<8x32xf32>
    %26 = math.tanh %25 : vector<8x32xf32>
    %cst_15 = arith.constant dense<0.000000e+00> : vector<8x32xf32>
    %27 = tpu.matmul %26, %10, %cst_15 {dimension_numbers = #tpu.dot_dimension_numbers<[1], [0], [0], [1], [0, 0, 1, 1], [], []>} : vector<8x32xf32>, vector<32x32xf32>, vector<8x32xf32> -> vector<8x32xf32>
    %28 = arith.maximumf %22, %27 : vector<8x32xf32>
    %29 = vector.extract_strided_slice %8 {offsets = [24, 0], sizes = [8, 32], strides = [1, 1]} : vector<64x32xf32> to vector<8x32xf32>
    %cst_16 = arith.constant dense<0.000000e+00> : vector<8x32xf32>
    %30 = tpu.matmul %26, %9, %cst_16 {dimension_numbers = #tpu.dot_dimension_numbers<[1], [0], [0], [1], [0, 0, 1, 1], [], []>} : vector<8x32xf32>, vector<32x32xf32>, vector<8x32xf32> -> vector<8x32xf32>
    %31 = arith.addf %29, %30 : vector<8x32xf32>
    %32 = math.tanh %31 : vector<8x32xf32>
    %cst_17 = arith.constant dense<0.000000e+00> : vector<8x32xf32>
    %33 = tpu.matmul %32, %10, %cst_17 {dimension_numbers = #tpu.dot_dimension_numbers<[1], [0], [0], [1], [0, 0, 1, 1], [], []>} : vector<8x32xf32>, vector<32x32xf32>, vector<8x32xf32> -> vector<8x32xf32>
    %34 = arith.maximumf %28, %33 : vector<8x32xf32>
    %35 = vector.extract_strided_slice %8 {offsets = [32, 0], sizes = [8, 32], strides = [1, 1]} : vector<64x32xf32> to vector<8x32xf32>
    %cst_18 = arith.constant dense<0.000000e+00> : vector<8x32xf32>
    %36 = tpu.matmul %32, %9, %cst_18 {dimension_numbers = #tpu.dot_dimension_numbers<[1], [0], [0], [1], [0, 0, 1, 1], [], []>} : vector<8x32xf32>, vector<32x32xf32>, vector<8x32xf32> -> vector<8x32xf32>
    %37 = arith.addf %35, %36 : vector<8x32xf32>
    %38 = math.tanh %37 : vector<8x32xf32>
    %cst_19 = arith.constant dense<0.000000e+00> : vector<8x32xf32>
    %39 = tpu.matmul %38, %10, %cst_19 {dimension_numbers = #tpu.dot_dimension_numbers<[1], [0], [0], [1], [0, 0, 1, 1], [], []>} : vector<8x32xf32>, vector<32x32xf32>, vector<8x32xf32> -> vector<8x32xf32>
    %40 = arith.maximumf %34, %39 : vector<8x32xf32>
    %41 = vector.extract_strided_slice %8 {offsets = [40, 0], sizes = [8, 32], strides = [1, 1]} : vector<64x32xf32> to vector<8x32xf32>
    %cst_20 = arith.constant dense<0.000000e+00> : vector<8x32xf32>
    %42 = tpu.matmul %38, %9, %cst_20 {dimension_numbers = #tpu.dot_dimension_numbers<[1], [0], [0], [1], [0, 0, 1, 1], [], []>} : vector<8x32xf32>, vector<32x32xf32>, vector<8x32xf32> -> vector<8x32xf32>
    %43 = arith.addf %41, %42 : vector<8x32xf32>
    %44 = math.tanh %43 : vector<8x32xf32>
    %cst_21 = arith.constant dense<0.000000e+00> : vector<8x32xf32>
    %45 = tpu.matmul %44, %10, %cst_21 {dimension_numbers = #tpu.dot_dimension_numbers<[1], [0], [0], [1], [0, 0, 1, 1], [], []>} : vector<8x32xf32>, vector<32x32xf32>, vector<8x32xf32> -> vector<8x32xf32>
    %46 = arith.maximumf %40, %45 : vector<8x32xf32>
    %47 = vector.extract_strided_slice %8 {offsets = [48, 0], sizes = [8, 32], strides = [1, 1]} : vector<64x32xf32> to vector<8x32xf32>
    %cst_22 = arith.constant dense<0.000000e+00> : vector<8x32xf32>
    %48 = tpu.matmul %44, %9, %cst_22 {dimension_numbers = #tpu.dot_dimension_numbers<[1], [0], [0], [1], [0, 0, 1, 1], [], []>} : vector<8x32xf32>, vector<32x32xf32>, vector<8x32xf32> -> vector<8x32xf32>
    %49 = arith.addf %47, %48 : vector<8x32xf32>
    %50 = math.tanh %49 : vector<8x32xf32>
    %cst_23 = arith.constant dense<0.000000e+00> : vector<8x32xf32>
    %51 = tpu.matmul %50, %10, %cst_23 {dimension_numbers = #tpu.dot_dimension_numbers<[1], [0], [0], [1], [0, 0, 1, 1], [], []>} : vector<8x32xf32>, vector<32x32xf32>, vector<8x32xf32> -> vector<8x32xf32>
    %52 = arith.maximumf %46, %51 : vector<8x32xf32>
    %53 = vector.extract_strided_slice %8 {offsets = [56, 0], sizes = [8, 32], strides = [1, 1]} : vector<64x32xf32> to vector<8x32xf32>
    %cst_24 = arith.constant dense<0.000000e+00> : vector<8x32xf32>
    %54 = tpu.matmul %50, %9, %cst_24 {dimension_numbers = #tpu.dot_dimension_numbers<[1], [0], [0], [1], [0, 0, 1, 1], [], []>} : vector<8x32xf32>, vector<32x32xf32>, vector<8x32xf32> -> vector<8x32xf32>
    %55 = arith.addf %53, %54 : vector<8x32xf32>
    %56 = math.tanh %55 : vector<8x32xf32>
    %cst_25 = arith.constant dense<0.000000e+00> : vector<8x32xf32>
    %57 = tpu.matmul %56, %10, %cst_25 {dimension_numbers = #tpu.dot_dimension_numbers<[1], [0], [0], [1], [0, 0, 1, 1], [], []>} : vector<8x32xf32>, vector<32x32xf32>, vector<8x32xf32> -> vector<8x32xf32>
    %58 = arith.maximumf %52, %57 : vector<8x32xf32>
    %c0_26 = arith.constant 0 : index
    %c0_27 = arith.constant 0 : index
    %59 = vector.load %arg5[%c0_26, %c0_27] : memref<1x32xf32, #tpu.memory_space<vmem>>, vector<1x32xf32>
    %60 = vector.broadcast %59 : vector<1x32xf32> to vector<8x32xf32>
    %61 = arith.addf %58, %60 : vector<8x32xf32>
    %c0_28 = arith.constant 0 : index
    %c0_29 = arith.constant 0 : index
    %62 = vector.load %arg6[%c0_28, %c0_29] : memref<32x128xf32, #tpu.memory_space<vmem>>, vector<32x128xf32>
    %cst_30 = arith.constant dense<0.000000e+00> : vector<8x128xf32>
    %63 = tpu.matmul %61, %62, %cst_30 {dimension_numbers = #tpu.dot_dimension_numbers<[1], [0], [0], [1], [0, 0, 1, 1], [], []>} : vector<8x32xf32>, vector<32x128xf32>, vector<8x128xf32> -> vector<8x128xf32>
    %c0_31 = arith.constant 0 : index
    %c0_32 = arith.constant 0 : index
    %64 = vector.load %arg7[%c0_31, %c0_32] : memref<1x128xf32, #tpu.memory_space<vmem>>, vector<1x128xf32>
    %65 = vector.broadcast %64 : vector<1x128xf32> to vector<8x128xf32>
    %66 = arith.addf %63, %65 : vector<8x128xf32>
    %c0_33 = arith.constant 0 : index
    %c0_34 = arith.constant 0 : index
    %67 = vector.load %arg8[%c0_33, %c0_34] : memref<8x128xf32, #tpu.memory_space<vmem>>, vector<8x128xf32>
    tpu.vector_store %arg8[%c0_33, %c0_34], %66 {strides = array<i32>} : memref<8x128xf32, #tpu.memory_space<vmem>>, vector<8x128xf32>,
    return
  }
  func.func @transform_0(%arg0: i32) -> (i32, i32) {
    %c0_i32 = arith.constant 0 : i32
    %c0_i32_0 = arith.constant 0 : i32
    %c0_i32_1 = arith.constant 0 : i32
    return %c0_i32, %c0_i32_0 : i32, i32
  }
  func.func @transform_1(%arg0: i32) -> (i32, i32) {
    %c0_i32 = arith.constant 0 : i32
    %c0_i32_0 = arith.constant 0 : i32
    %c0_i32_1 = arith.constant 0 : i32
    return %c0_i32, %c0_i32_0 : i32, i32
  }
  func.func @transform_2(%arg0: i32) -> (i32, i32) {
    %c0_i32 = arith.constant 0 : i32
    %c0_i32_0 = arith.constant 0 : i32
    %c0_i32_1 = arith.constant 0 : i32
    return %c0_i32, %c0_i32_0 : i32, i32
  }
  func.func @transform_3(%arg0: i32) -> (i32, i32) {
    %c0_i32 = arith.constant 0 : i32
    %c0_i32_0 = arith.constant 0 : i32
    %c0_i32_1 = arith.constant 0 : i32
    return %c0_i32, %c0_i32_0 : i32, i32
  }
  func.func @transform_4(%arg0: i32) -> (i32, i32) {
    %c0_i32 = arith.constant 0 : i32
    %c0_i32_0 = arith.constant 0 : i32
    %c0_i32_1 = arith.constant 0 : i32
    return %c0_i32, %c0_i32_0 : i32, i32
  }
  func.func @transform_5(%arg0: i32) -> (i32, i32) {
    %c0_i32 = arith.constant 0 : i32
    %c0_i32_0 = arith.constant 0 : i32
    %c0_i32_1 = arith.constant 0 : i32
    return %c0_i32, %c0_i32_0 : i32, i32
  }
  func.func @transform_6(%arg0: i32) -> (i32, i32) {
    %c0_i32 = arith.constant 0 : i32
    %c0_i32_0 = arith.constant 0 : i32
    %c0_i32_1 = arith.constant 0 : i32
    return %c0_i32, %c0_i32_0 : i32, i32
  }
  func.func @transform_7(%arg0: i32) -> (i32, i32) {
    %c0_i32 = arith.constant 0 : i32
    %c0_i32_0 = arith.constant 0 : i32
    %c0_i32_1 = arith.constant 0 : i32
    return %c0_i32, %c0_i32_0 : i32, i32
  }
}

</mosaic_0001>

<llo_original>
// kernel: tpu_custom_call.1
$region0: #{tpu_custom_call.1}
  #allocation0 [shape = 'u32[]', space=smem, size = 0x4, offset = 0x4, fixed_abs, tag = 'smem constant byte address 0x4 - core index']
  #allocation1 [shape = 'u32[72,128]{1,0:T(1,128)}', space=vmem, size = 0x9000, scoped, tag = 'internal scratch']
  %s0 = inlined_call_operand.vmem [shape: s32[64,1], index: 0, kind: input, shape index: {}]
  %s1 = inlined_call_operand.vmem [shape: f32[50,32], index: 1, kind: input, shape index: {}]
  %s2 = inlined_call_operand.vmem [shape: f32[32,32], index: 2, kind: input, shape index: {}]
  %s3 = inlined_call_operand.vmem [shape: f32[32,32], index: 3, kind: input, shape index: {}]
  %s4 = inlined_call_operand.vmem [shape: f32[1,32], index: 4, kind: input, shape index: {}]
  %s5 = inlined_call_operand.vmem [shape: f32[32,128], index: 5, kind: input, shape index: {}]
  %s6 = inlined_call_operand.vmem [shape: f32[1,128], index: 6, kind: input, shape index: {}]
  %s7 = inlined_call_operand.hbm [shape: f32[8,128], index: 7, kind: output, shape index: {}]
  %s8 = sld [smem:[#allocation0]]
  $region38: #{tpu_custom_call.1} parent=0
    _
  %s10 = ssub.s32 1, %s8
  %s11 = scalar_select 0, %s10, %s8
  $region1: #{tpu_custom_call.1} parent=0
    #allocation2 [shape = 'u8[4096]{0}', space=vmem, size = 0x1000, scoped, tag = 'output window, operand 0, single buffered']
    #allocation3 [shape = 's32[1]{0}', space=sflag, size = 0x4, scoped, tag = 'scoped memory for tpu_custom_call.1']
    %12 = vsyncpa [#allocation3], 0
    // Predicated region
    $region2: #{tpu_custom_call.1} parent=1 // pred_check
      _
    $region3: #{tpu_custom_call.1} parent=1 // pred_check_branch
      %14 = sbr.rel (0) target = $region5
    $region4: #{tpu_custom_call.1} parent=1 // pred_region
      _
    $region5: #{tpu_custom_call.1} parent=1 // pred_fallthru
      _
    // Predicated region
    $region6: #{tpu_custom_call.1} parent=1 // pred_check
      _
    $region7: #{tpu_custom_call.1} parent=1 // pred_check_branch
      %16 = sbr.rel (0) target = $region9
    $region8: #{tpu_custom_call.1} parent=1 // pred_region
      _
    $region9: #{tpu_custom_call.1} parent=1 // pred_fallthru
      _
    // Predicated region
    $region10: #{tpu_custom_call.1} parent=1 // pred_check
      _
    $region11: #{tpu_custom_call.1} parent=1 // pred_check_branch
      %18 = sbr.rel (0) target = $region13
    $region12: #{tpu_custom_call.1} parent=1 // pred_region
      _
    $region13: #{tpu_custom_call.1} parent=1 // pred_fallthru
      _
    // Predicated region
    $region14: #{tpu_custom_call.1} parent=1 // pred_check
      _
    $region15: #{tpu_custom_call.1} parent=1 // pred_check_branch
      %20 = sbr.rel (0) target = $region17
    $region16: #{tpu_custom_call.1} parent=1 // pred_region
      _
    $region17: #{tpu_custom_call.1} parent=1 // pred_fallthru
      _
    // Predicated region
    $region18: #{tpu_custom_call.1} parent=1 // pred_check
      _
    $region19: #{tpu_custom_call.1} parent=1 // pred_check_branch
      %22 = sbr.rel (0) target = $region21
    $region20: #{tpu_custom_call.1} parent=1 // pred_region
      _
    $region21: #{tpu_custom_call.1} parent=1 // pred_fallthru
      _
    // Predicated region
    $region22: #{tpu_custom_call.1} parent=1 // pred_check
      _
    $region23: #{tpu_custom_call.1} parent=1 // pred_check_branch
      %24 = sbr.rel (0) target = $region25
    $region24: #{tpu_custom_call.1} parent=1 // pred_region
      _
    $region25: #{tpu_custom_call.1} parent=1 // pred_fallthru
      _
    // Predicated region
    $region26: #{tpu_custom_call.1} parent=1 // pred_check
      _
    $region27: #{tpu_custom_call.1} parent=1 // pred_check_branch
      %26 = sbr.rel (0) target = $region29
    $region28: #{tpu_custom_call.1} parent=1 // pred_region
      _
    $region29: #{tpu_custom_call.1} parent=1 // pred_fallthru
      _
    %v27 = vld [vmem:[%s0] sm:$0xff]
    %v28 = vld [vmem:[%s0 + $0x8] sm:$0xff]
    %v29 = vld [vmem:[%s0 + $0x10] sm:$0xff]
    %v30 = vld [vmem:[%s0 + $0x18] sm:$0xff]
    %v31 = vld [vmem:[%s0 + $0x20] sm:$0xff]
    %v32 = vld [vmem:[%s0 + $0x28] sm:$0xff]
    %v33 = vld [vmem:[%s0 + $0x30] sm:$0xff]
    %v34 = vld [vmem:[%s0 + $0x38] sm:$0xff]
    %v35 = vlaneseq
    %v36 = vand.u32 %v35, 127
    %37 = vset.pattern.permute.xlu0 0
    %38 = vperm.xlu0 %37, %v27
    %v39 = vpop.permute.xlu0 %38
    %40 = vset.pattern.permute.xlu0 0
    %41 = vperm.xlu0 %40, %v28
    %v42 = vpop.permute.xlu0 %41
    %43 = vset.pattern.permute.xlu0 0
    %44 = vperm.xlu0 %43, %v29
    %v45 = vpop.permute.xlu0 %44
    %46 = vset.pattern.permute.xlu0 0
    %47 = vperm.xlu0 %46, %v30
    %v48 = vpop.permute.xlu0 %47
    %49 = vset.pattern.permute.xlu0 0
    %50 = vperm.xlu0 %49, %v31
    %v51 = vpop.permute.xlu0 %50
    %52 = vset.pattern.permute.xlu0 0
    %53 = vperm.xlu0 %52, %v32
    %v54 = vpop.permute.xlu0 %53
    %55 = vset.pattern.permute.xlu0 0
    %56 = vperm.xlu0 %55, %v33
    %v57 = vpop.permute.xlu0 %56
    %58 = vset.pattern.permute.xlu0 0
    %59 = vperm.xlu0 %58, %v34
    %v60 = vpop.permute.xlu0 %59
    %vm61 = vcmp.eq.s32.totalorder %v36, %v39
    %vm62 = vcmp.eq.s32.totalorder %v36, %v42
    %vm63 = vcmp.eq.s32.totalorder %v36, %v45
    %vm64 = vcmp.eq.s32.totalorder %v36, %v48
    %vm65 = vcmp.eq.s32.totalorder %v36, %v51
    %vm66 = vcmp.eq.s32.totalorder %v36, %v54
    %vm67 = vcmp.eq.s32.totalorder %v36, %v57
    %vm68 = vcmp.eq.s32.totalorder %v36, %v60
    %v69 = vsel %vm61, 1.0, 0.0
    %v70 = vsel %vm62, 1.0, 0.0
    %v71 = vsel %vm63, 1.0, 0.0
    %v72 = vsel %vm64, 1.0, 0.0
    %v73 = vsel %vm65, 1.0, 0.0
    %v74 = vsel %vm66, 1.0, 0.0
    %v75 = vsel %vm67, 1.0, 0.0
    %v76 = vsel %vm68, 1.0, 0.0
    %v77 = vld [vmem:[%s1] sm:$0xff]
    %v78 = vld [vmem:[%s1 + $0x8] sm:$0xff]
    %v79 = vld [vmem:[%s1 + $0x10] sm:$0xff]
    %v80 = vld [vmem:[%s1 + $0x18] sm:$0xff]
    %v81 = vld [vmem:[%s1 + $0x20] sm:$0xff]
    %v82 = vld [vmem:[%s1 + $0x28] sm:$0xff]
    %v83 = vld [vmem:[%s1 + $0x30] sm:$0x3]
    %vm84 = vcmask 408576
    %v86 = vsel %vm84, %v69, 0
    %v89 = vsel %vm84, %v70, 0
    %v92 = vsel %vm84, %v71, 0
    %v95 = vsel %vm84, %v72, 0
    %v98 = vsel %vm84, %v73, 0
    %v101 = vsel %vm84, %v74, 0
    %v104 = vsel %vm84, %v75, 0
    %v107 = vsel %vm84, %v76, 0
    %vm109 = vcmask 1041408
    %v111 = vsel %vm109, %v83, 0
    %113 = vmatpush.msra.mxu0 0.0
    %114 = vmatpush.msra.mxu0 0.0
    %115 = vmatpush.msra.mxu0 0.0
    %116 = vmatpush.msra.mxu0 0.0
    %117 = vmatpush.msra.mxu0 0.0
    %118 = vmatpush.msra.mxu0 0.0
    %119 = vmatpush.msra.mxu0 0.0
    %120 = vmatpush.msra.mxu0 0.0
    %121 = vmatpush.msra.mxu0 0.0
    %122 = vmatpush.msra.mxu0 %v111
    %123 = vmatpush.msra.mxu0 %v82
    %124 = vmatpush.msra.mxu0 %v81
    %125 = vmatpush.msra.mxu0 %v80
    %126 = vmatpush.msra.mxu0 %v79
    %127 = vmatpush.msra.mxu0 %v78
    %128 = vmatpush.msra.mxu0 %v77
    %129 = vmatmul.f32.gmra.mxu0 %v86
    %v130 = vpop.f32.mrf.mxu0
    %v131 = vadd.f32 0.0, %v130
    %132 = vmatmul.f32.gmra.mxu0 %v89
    %v133 = vpop.f32.mrf.mxu0
    %v134 = vadd.f32 0.0, %v133
    %135 = vmatmul.f32.gmra.mxu0 %v92
    %v136 = vpop.f32.mrf.mxu0
    %v137 = vadd.f32 0.0, %v136
    %138 = vmatmul.f32.gmra.mxu0 %v95
    %v139 = vpop.f32.mrf.mxu0
    %v140 = vadd.f32 0.0, %v139
    %141 = vmatmul.f32.gmra.mxu0 %v98
    %v142 = vpop.f32.mrf.mxu0
    %v143 = vadd.f32 0.0, %v142
    %144 = vmatmul.f32.gmra.mxu0 %v101
    %v145 = vpop.f32.mrf.mxu0
    %v146 = vadd.f32 0.0, %v145
    %147 = vmatmul.f32.gmra.mxu0 %v104
    %v148 = vpop.f32.mrf.mxu0
    %v149 = vadd.f32 0.0, %v148
    %150 = vmatmul.f32.gmra.mxu0 %v107
    %v151 = vpop.f32.mrf.mxu0
    %v152 = vadd.f32 0.0, %v151
    %153 = vdwg.mxu0
    %v154 = vld [vmem:[%s2] sm:$0xff]
    %v155 = vld [vmem:[%s2 + $0x8] sm:$0xff]
    %v156 = vld [vmem:[%s2 + $0x10] sm:$0xff]
    %v157 = vld [vmem:[%s2 + $0x18] sm:$0xff]
    %v158 = vld [vmem:[%s3] sm:$0xff]
    %v159 = vld [vmem:[%s3 + $0x8] sm:$0xff]
    %v160 = vld [vmem:[%s3 + $0x10] sm:$0xff]
    %v161 = vld [vmem:[%s3 + $0x18] sm:$0xff]
    %vm162 = vcmask 261120
    %v164 = vsel %vm162, 0.0, 0
    %166 = vmatpush.msra.mxu0 0.0
    %167 = vmatpush.msra.mxu0 0.0
    %168 = vmatpush.msra.mxu0 0.0
    %169 = vmatpush.msra.mxu0 0.0
    %170 = vmatpush.msra.mxu0 0.0
    %171 = vmatpush.msra.mxu0 0.0
    %172 = vmatpush.msra.mxu0 0.0
    %173 = vmatpush.msra.mxu0 0.0
    %174 = vmatpush.msra.mxu0 0.0
    %175 = vmatpush.msra.mxu0 0.0
    %176 = vmatpush.msra.mxu0 0.0
    %177 = vmatpush.msra.mxu0 0.0
    %178 = vmatpush.msra.mxu0 %v157
    %179 = vmatpush.msra.mxu0 %v156
    %180 = vmatpush.msra.mxu0 %v155
    %181 = vmatpush.msra.mxu0 %v154
    %182 = vmatmul.f32.gmra.mxu0 %v164
    %v183 = vpop.f32.mrf.mxu0
    %v184 = vadd.f32 0.0, %v183
    %185 = vdwg.mxu0
    %v186 = vadd.f32 %v131, %v184
    %v187 = vtanh.pop %v186
    %v189 = vsel %vm162, %v187, 0
    %191 = vmatpush.msra.mxu0 0.0
    %192 = vmatpush.msra.mxu0 0.0
    %193 = vmatpush.msra.mxu0 0.0
    %194 = vmatpush.msra.mxu0 0.0
    %195 = vmatpush.msra.mxu0 0.0
    %196 = vmatpush.msra.mxu0 0.0
    %197 = vmatpush.msra.mxu0 0.0
    %198 = vmatpush.msra.mxu0 0.0
    %199 = vmatpush.msra.mxu0 0.0
    %200 = vmatpush.msra.mxu0 0.0
    %201 = vmatpush.msra.mxu0 0.0
    %202 = vmatpush.msra.mxu0 0.0
    %203 = vmatpush.msra.mxu0 %v161
    %204 = vmatpush.msra.mxu0 %v160
    %205 = vmatpush.msra.mxu0 %v159
    %206 = vmatpush.msra.mxu0 %v158
    %207 = vmatmul.f32.gmra.mxu0 %v189
    %v208 = vpop.f32.mrf.mxu0
    %v209 = vadd.f32 0.0, %v208
    %210 = vdwg.mxu0
    %211 = vmatpush.msra.mxu0 0.0
    %212 = vmatpush.msra.mxu0 0.0
    %213 = vmatpush.msra.mxu0 0.0
    %214 = vmatpush.msra.mxu0 0.0
    %215 = vmatpush.msra.mxu0 0.0
    %216 = vmatpush.msra.mxu0 0.0
    %217 = vmatpush.msra.mxu0 0.0
    %218 = vmatpush.msra.mxu0 0.0
    %219 = vmatpush.msra.mxu0 0.0
    %220 = vmatpush.msra.mxu0 0.0
    %221 = vmatpush.msra.mxu0 0.0
    %222 = vmatpush.msra.mxu0 0.0
    %223 = vmatpush.msra.mxu0 %v157
    %224 = vmatpush.msra.mxu0 %v156
    %225 = vmatpush.msra.mxu0 %v155
    %226 = vmatpush.msra.mxu0 %v154
    %227 = vmatmul.f32.gmra.mxu0 %v189
    %v228 = vpop.f32.mrf.mxu0
    %v229 = vadd.f32 0.0, %v228
    %230 = vdwg.mxu0
    %v231 = vadd.f32 %v134, %v229
    %v232 = vtanh.pop %v231
    %v234 = vsel %vm162, %v232, 0
    %236 = vmatpush.msra.mxu0 0.0
    %237 = vmatpush.msra.mxu0 0.0
    %238 = vmatpush.msra.mxu0 0.0
    %239 = vmatpush.msra.mxu0 0.0
    %240 = vmatpush.msra.mxu0 0.0
    %241 = vmatpush.msra.mxu0 0.0
    %242 = vmatpush.msra.mxu0 0.0
    %243 = vmatpush.msra.mxu0 0.0
    %244 = vmatpush.msra.mxu0 0.0
    %245 = vmatpush.msra.mxu0 0.0
    %246 = vmatpush.msra.mxu0 0.0
    %247 = vmatpush.msra.mxu0 0.0
    %248 = vmatpush.msra.mxu0 %v161
    %249 = vmatpush.msra.mxu0 %v160
    %250 = vmatpush.msra.mxu0 %v159
    %251 = vmatpush.msra.mxu0 %v158
    %252 = vmatmul.f32.gmra.mxu0 %v234
    %v253 = vpop.f32.mrf.mxu0
    %v254 = vadd.f32 0.0, %v253
    %255 = vdwg.mxu0
    %v256 = vmax.f32 %v209, %v254
    %257 = vmatpush.msra.mxu0 0.0
    %258 = vmatpush.msra.mxu0 0.0
    %259 = vmatpush.msra.mxu0 0.0
    %260 = vmatpush.msra.mxu0 0.0
    %261 = vmatpush.msra.mxu0 0.0
    %262 = vmatpush.msra.mxu0 0.0
    %263 = vmatpush.msra.mxu0 0.0
    %264 = vmatpush.msra.mxu0 0.0
    %265 = vmatpush.msra.mxu0 0.0
    %266 = vmatpush.msra.mxu0 0.0
    %267 = vmatpush.msra.mxu0 0.0
    %268 = vmatpush.msra.mxu0 0.0
    %269 = vmatpush.msra.mxu0 %v157
    %270 = vmatpush.msra.mxu0 %v156
    %271 = vmatpush.msra.mxu0 %v155
    %272 = vmatpush.msra.mxu0 %v154
    %273 = vmatmul.f32.gmra.mxu0 %v234
    %v274 = vpop.f32.mrf.mxu0
    %v275 = vadd.f32 0.0, %v274
    %276 = vdwg.mxu0
    %v277 = vadd.f32 %v137, %v275
    %v278 = vtanh.pop %v277
    %v280 = vsel %vm162, %v278, 0
    %282 = vmatpush.msra.mxu0 0.0
    %283 = vmatpush.msra.mxu0 0.0
    %284 = vmatpush.msra.mxu0 0.0
    %285 = vmatpush.msra.mxu0 0.0
    %286 = vmatpush.msra.mxu0 0.0
    %287 = vmatpush.msra.mxu0 0.0
    %288 = vmatpush.msra.mxu0 0.0
    %289 = vmatpush.msra.mxu0 0.0
    %290 = vmatpush.msra.mxu0 0.0
    %291 = vmatpush.msra.mxu0 0.0
    %292 = vmatpush.msra.mxu0 0.0
    %293 = vmatpush.msra.mxu0 0.0
    %294 = vmatpush.msra.mxu0 %v161
    %295 = vmatpush.msra.mxu0 %v160
    %296 = vmatpush.msra.mxu0 %v159
    %297 = vmatpush.msra.mxu0 %v158
    %298 = vmatmul.f32.gmra.mxu0 %v280
    %v299 = vpop.f32.mrf.mxu0
    %v300 = vadd.f32 0.0, %v299
    %301 = vdwg.mxu0
    %v302 = vmax.f32 %v256, %v300
    %303 = vmatpush.msra.mxu0 0.0
    %304 = vmatpush.msra.mxu0 0.0
    %305 = vmatpush.msra.mxu0 0.0
    %306 = vmatpush.msra.mxu0 0.0
    %307 = vmatpush.msra.mxu0 0.0
    %308 = vmatpush.msra.mxu0 0.0
    %309 = vmatpush.msra.mxu0 0.0
    %310 = vmatpush.msra.mxu0 0.0
    %311 = vmatpush.msra.mxu0 0.0
    %312 = vmatpush.msra.mxu0 0.0
    %313 = vmatpush.msra.mxu0 0.0
    %314 = vmatpush.msra.mxu0 0.0
    %315 = vmatpush.msra.mxu0 %v157
    %316 = vmatpush.msra.mxu0 %v156
    %317 = vmatpush.msra.mxu0 %v155
    %318 = vmatpush.msra.mxu0 %v154
    %319 = vmatmul.f32.gmra.mxu0 %v280
    %v320 = vpop.f32.mrf.mxu0
    %v321 = vadd.f32 0.0, %v320
    %322 = vdwg.mxu0
    %v323 = vadd.f32 %v140, %v321
    %v324 = vtanh.pop %v323
    %v326 = vsel %vm162, %v324, 0
    %328 = vmatpush.msra.mxu0 0.0
    %329 = vmatpush.msra.mxu0 0.0
    %330 = vmatpush.msra.mxu0 0.0
    %331 = vmatpush.msra.mxu0 0.0
    %332 = vmatpush.msra.mxu0 0.0
    %333 = vmatpush.msra.mxu0 0.0
    %334 = vmatpush.msra.mxu0 0.0
    %335 = vmatpush.msra.mxu0 0.0
    %336 = vmatpush.msra.mxu0 0.0
    %337 = vmatpush.msra.mxu0 0.0
    %338 = vmatpush.msra.mxu0 0.0
    %339 = vmatpush.msra.mxu0 0.0
    %340 = vmatpush.msra.mxu0 %v161
    %341 = vmatpush.msra.mxu0 %v160
    %342 = vmatpush.msra.mxu0 %v159
    %343 = vmatpush.msra.mxu0 %v158
    %344 = vmatmul.f32.gmra.mxu0 %v326
    %v345 = vpop.f32.mrf.mxu0
    %v346 = vadd.f32 0.0, %v345
    %347 = vdwg.mxu0
    %v348 = vmax.f32 %v302, %v346
    %349 = vmatpush.msra.mxu0 0.0
    %350 = vmatpush.msra.mxu0 0.0
    %351 = vmatpush.msra.mxu0 0.0
    %352 = vmatpush.msra.mxu0 0.0
    %353 = vmatpush.msra.mxu0 0.0
    %354 = vmatpush.msra.mxu0 0.0
    %355 = vmatpush.msra.mxu0 0.0
    %356 = vmatpush.msra.mxu0 0.0
    %357 = vmatpush.msra.mxu0 0.0
    %358 = vmatpush.msra.mxu0 0.0
    %359 = vmatpush.msra.mxu0 0.0
    %360 = vmatpush.msra.mxu0 0.0
    %361 = vmatpush.msra.mxu0 %v157
    %362 = vmatpush.msra.mxu0 %v156
    %363 = vmatpush.msra.mxu0 %v155
    %364 = vmatpush.msra.mxu0 %v154
    %365 = vmatmul.f32.gmra.mxu0 %v326
    %v366 = vpop.f32.mrf.mxu0
    %v367 = vadd.f32 0.0, %v366
    %368 = vdwg.mxu0
    %v369 = vadd.f32 %v143, %v367
    %v370 = vtanh.pop %v369
    %v372 = vsel %vm162, %v370, 0
    %374 = vmatpush.msra.mxu0 0.0
    %375 = vmatpush.msra.mxu0 0.0
    %376 = vmatpush.msra.mxu0 0.0
    %377 = vmatpush.msra.mxu0 0.0
    %378 = vmatpush.msra.mxu0 0.0
    %379 = vmatpush.msra.mxu0 0.0
    %380 = vmatpush.msra.mxu0 0.0
    %381 = vmatpush.msra.mxu0 0.0
    %382 = vmatpush.msra.mxu0 0.0
    %383 = vmatpush.msra.mxu0 0.0
    %384 = vmatpush.msra.mxu0 0.0
    %385 = vmatpush.msra.mxu0 0.0
    %386 = vmatpush.msra.mxu0 %v161
    %387 = vmatpush.msra.mxu0 %v160
    %388 = vmatpush.msra.mxu0 %v159
    %389 = vmatpush.msra.mxu0 %v158
    %390 = vmatmul.f32.gmra.mxu0 %v372
    %v391 = vpop.f32.mrf.mxu0
    %v392 = vadd.f32 0.0, %v391
    %393 = vdwg.mxu0
    %v394 = vmax.f32 %v348, %v392
    %395 = vmatpush.msra.mxu0 0.0
    %396 = vmatpush.msra.mxu0 0.0
    %397 = vmatpush.msra.mxu0 0.0
    %398 = vmatpush.msra.mxu0 0.0
    %399 = vmatpush.msra.mxu0 0.0
    %400 = vmatpush.msra.mxu0 0.0
    %401 = vmatpush.msra.mxu0 0.0
    %402 = vmatpush.msra.mxu0 0.0
    %403 = vmatpush.msra.mxu0 0.0
    %404 = vmatpush.msra.mxu0 0.0
    %405 = vmatpush.msra.mxu0 0.0
    %406 = vmatpush.msra.mxu0 0.0
    %407 = vmatpush.msra.mxu0 %v157
    %408 = vmatpush.msra.mxu0 %v156
    %409 = vmatpush.msra.mxu0 %v155
    %410 = vmatpush.msra.mxu0 %v154
    %411 = vmatmul.f32.gmra.mxu0 %v372
    %v412 = vpop.f32.mrf.mxu0
    %v413 = vadd.f32 0.0, %v412
    %414 = vdwg.mxu0
    %v415 = vadd.f32 %v146, %v413
    %v416 = vtanh.pop %v415
    %v418 = vsel %vm162, %v416, 0
    %420 = vmatpush.msra.mxu0 0.0
    %421 = vmatpush.msra.mxu0 0.0
    %422 = vmatpush.msra.mxu0 0.0
    %423 = vmatpush.msra.mxu0 0.0
    %424 = vmatpush.msra.mxu0 0.0
    %425 = vmatpush.msra.mxu0 0.0
    %426 = vmatpush.msra.mxu0 0.0
    %427 = vmatpush.msra.mxu0 0.0
    %428 = vmatpush.msra.mxu0 0.0
    %429 = vmatpush.msra.mxu0 0.0
    %430 = vmatpush.msra.mxu0 0.0
    %431 = vmatpush.msra.mxu0 0.0
    %432 = vmatpush.msra.mxu0 %v161
    %433 = vmatpush.msra.mxu0 %v160
    %434 = vmatpush.msra.mxu0 %v159
    %435 = vmatpush.msra.mxu0 %v158
    %436 = vmatmul.f32.gmra.mxu0 %v418
    %v437 = vpop.f32.mrf.mxu0
    %v438 = vadd.f32 0.0, %v437
    %439 = vdwg.mxu0
    %v440 = vmax.f32 %v394, %v438
    %441 = vmatpush.msra.mxu0 0.0
    %442 = vmatpush.msra.mxu0 0.0
    %443 = vmatpush.msra.mxu0 0.0
    %444 = vmatpush.msra.mxu0 0.0
    %445 = vmatpush.msra.mxu0 0.0
    %446 = vmatpush.msra.mxu0 0.0
    %447 = vmatpush.msra.mxu0 0.0
    %448 = vmatpush.msra.mxu0 0.0
    %449 = vmatpush.msra.mxu0 0.0
    %450 = vmatpush.msra.mxu0 0.0
    %451 = vmatpush.msra.mxu0 0.0
    %452 = vmatpush.msra.mxu0 0.0
    %453 = vmatpush.msra.mxu0 %v157
    %454 = vmatpush.msra.mxu0 %v156
    %455 = vmatpush.msra.mxu0 %v155
    %456 = vmatpush.msra.mxu0 %v154
    %457 = vmatmul.f32.gmra.mxu0 %v418
    %v458 = vpop.f32.mrf.mxu0
    %v459 = vadd.f32 0.0, %v458
    %460 = vdwg.mxu0
    %v461 = vadd.f32 %v149, %v459
    %v462 = vtanh.pop %v461
    %v464 = vsel %vm162, %v462, 0
    %466 = vmatpush.msra.mxu0 0.0
    %467 = vmatpush.msra.mxu0 0.0
    %468 = vmatpush.msra.mxu0 0.0
    %469 = vmatpush.msra.mxu0 0.0
    %470 = vmatpush.msra.mxu0 0.0
    %471 = vmatpush.msra.mxu0 0.0
    %472 = vmatpush.msra.mxu0 0.0
    %473 = vmatpush.msra.mxu0 0.0
    %474 = vmatpush.msra.mxu0 0.0
    %475 = vmatpush.msra.mxu0 0.0
    %476 = vmatpush.msra.mxu0 0.0
    %477 = vmatpush.msra.mxu0 0.0
    %478 = vmatpush.msra.mxu0 %v161
    %479 = vmatpush.msra.mxu0 %v160
    %480 = vmatpush.msra.mxu0 %v159
    %481 = vmatpush.msra.mxu0 %v158
    %482 = vmatmul.f32.gmra.mxu0 %v464
    %v483 = vpop.f32.mrf.mxu0
    %v484 = vadd.f32 0.0, %v483
    %485 = vdwg.mxu0
    %v486 = vmax.f32 %v440, %v484
    %487 = vmatpush.msra.mxu0 0.0
    %488 = vmatpush.msra.mxu0 0.0
    %489 = vmatpush.msra.mxu0 0.0
    %490 = vmatpush.msra.mxu0 0.0
    %491 = vmatpush.msra.mxu0 0.0
    %492 = vmatpush.msra.mxu0 0.0
    %493 = vmatpush.msra.mxu0 0.0
    %494 = vmatpush.msra.mxu0 0.0
    %495 = vmatpush.msra.mxu0 0.0
    %496 = vmatpush.msra.mxu0 0.0
    %497 = vmatpush.msra.mxu0 0.0
    %498 = vmatpush.msra.mxu0 0.0
    %499 = vmatpush.msra.mxu0 %v157
    %500 = vmatpush.msra.mxu0 %v156
    %501 = vmatpush.msra.mxu0 %v155
    %502 = vmatpush.msra.mxu0 %v154
    %503 = vmatmul.f32.gmra.mxu0 %v464
    %v504 = vpop.f32.mrf.mxu0
    %v505 = vadd.f32 0.0, %v504
    %506 = vdwg.mxu0
    %v507 = vadd.f32 %v152, %v505
    %v508 = vtanh.pop %v507
    %v510 = vsel %vm162, %v508, 0
    %512 = vmatpush.msra.mxu0 0.0
    %513 = vmatpush.msra.mxu0 0.0
    %514 = vmatpush.msra.mxu0 0.0
    %515 = vmatpush.msra.mxu0 0.0
    %516 = vmatpush.msra.mxu0 0.0
    %517 = vmatpush.msra.mxu0 0.0
    %518 = vmatpush.msra.mxu0 0.0
    %519 = vmatpush.msra.mxu0 0.0
    %520 = vmatpush.msra.mxu0 0.0
    %521 = vmatpush.msra.mxu0 0.0
    %522 = vmatpush.msra.mxu0 0.0
    %523 = vmatpush.msra.mxu0 0.0
    %524 = vmatpush.msra.mxu0 %v161
    %525 = vmatpush.msra.mxu0 %v160
    %526 = vmatpush.msra.mxu0 %v159
    %527 = vmatpush.msra.mxu0 %v158
    %528 = vmatmul.f32.gmra.mxu0 %v510
    %v529 = vpop.f32.mrf.mxu0
    %v530 = vadd.f32 0.0, %v529
    %531 = vdwg.mxu0
    %v532 = vmax.f32 %v486, %v530
    %v533 = vld [vmem:[%s4] sm:$0x1]
    %v535 = vperm.slane %v533, 0
    %v537 = vadd.f32 %v532, %v535
    %v538 = vld [vmem:[%s5] sm:$0xff]
    %v539 = vld [vmem:[%s5 + $0x8] sm:$0xff]
    %v540 = vld [vmem:[%s5 + $0x10] sm:$0xff]
    %v541 = vld [vmem:[%s5 + $0x18] sm:$0xff]
    %v542 = vld [vmem:[%s6] sm:$0x1]
    %v544 = vperm.slane %v542, 0
    %v547 = vsel %vm162, %v537, 0
    %549 = vmatpush.msra.mxu0 0.0
    %550 = vmatpush.msra.mxu0 0.0
    %551 = vmatpush.msra.mxu0 0.0
    %552 = vmatpush.msra.mxu0 0.0
    %553 = vmatpush.msra.mxu0 0.0
    %554 = vmatpush.msra.mxu0 0.0
    %555 = vmatpush.msra.mxu0 0.0
    %556 = vmatpush.msra.mxu0 0.0
    %557 = vmatpush.msra.mxu0 0.0
    %558 = vmatpush.msra.mxu0 0.0
    %559 = vmatpush.msra.mxu0 0.0
    %560 = vmatpush.msra.mxu0 0.0
    %561 = vmatpush.msra.mxu0 %v541
    %562 = vmatpush.msra.mxu0 %v540
    %563 = vmatpush.msra.mxu0 %v539
    %564 = vmatpush.msra.mxu0 %v538
    %565 = vmatmul.f32.gmra.mxu0 %v547
    %v566 = vpop.f32.mrf.mxu0
    %v567 = vadd.f32 %v544, %v566
    %568 = vdwg.mxu0
    %569 = vst [vmem:[#allocation2] sm:$0xff] %v567
    // Predicated region
    $region30: #{tpu_custom_call.1} parent=1 // pred_check
      _
    $region31: #{tpu_custom_call.1} parent=1 // pred_check_branch
      %571 = sbr.rel (0) target = $region33
    $region32: #{tpu_custom_call.1} parent=1 // pred_region
      %573 = vsyncadd [#allocation3], 0
      %s575 = sshll.u32 [#allocation2], 4
      %s576 = int_to_ptr.vmem [resolvable:$true] %s575
      %s577 = sshll.u32 %s7, 4
      %s578 = int_to_ptr.hbm [resolvable:$true] %s577
      %580 = dma.vmem_to_hbm [thread:$0]  %s576, 128, %s578, [#allocation3]
    $region33: #{tpu_custom_call.1} parent=1 // pred_fallthru
      _
    // Predicated region
    $region34: #{tpu_custom_call.1} parent=1 // pred_check
      _
    $region35: #{tpu_custom_call.1} parent=1 // pred_check_branch
      %582 = sbr.rel (0) target = $region37
    $region36: #{tpu_custom_call.1} parent=1 // pred_region
      %584 = dma.done [#allocation3], 128
    $region37: #{tpu_custom_call.1} parent=1 // pred_fallthru
      _
    %585 = vsyncpa [#allocation3], 1

</llo_original>
